<compile_context>
chip_gen: v6e
topology: v6e:2x2x1
jax: 0.10.0
libtpu: 0.0.40
codegen_flags: <defaults>
</compile_context>

<pallas_src>
import jax
import jax.numpy as jnp
from jax.experimental import pallas as pl
from jax.experimental.pallas import tpu as pltpu


def _round_up(n, m):
    return ((n + m - 1) // m) * m


def _cdiv(a, b):
    return -(-a // b)


def mlp_kernel(x_ref, w1_ref, b1_ref, w2_ref, b2_ref,
               w3_ref, b3_ref, w4r_ref, b4_ref, o_ref):
    cd = w1_ref.dtype            # MXU operand dtype (bf16 fast path or f32)

    # In-kernel operand cast: free on the VPU while the MXU is the bottleneck,
    # and avoids a wrapper-side HBM read+write pass over x.
    x = x_ref[...].astype(cd)

    # Layer 1: (tb, D) @ (D, 128) -> f32 accumulate; bias + ReLU in f32.
    h = jnp.dot(x, w1_ref[...], preferred_element_type=jnp.float32)
    h = jnp.maximum(h + b1_ref[...], 0.0)

    # Layer 2: (tb, 128) @ (128, 64)
    h = jnp.dot(h.astype(cd), w2_ref[...], preferred_element_type=jnp.float32)
    h = jnp.maximum(h + b2_ref[...], 0.0)

    # Layer 3: (tb, 64) @ (64, 32)
    h = jnp.dot(h.astype(cd), w3_ref[...], preferred_element_type=jnp.float32)
    h = jnp.maximum(h + b3_ref[...], 0.0)

    # Layer 4: (1, 32) . (tb, 32)^T -> (1, tb), produced directly in the
    # lane-dense output layout.  (~0.1% of FLOPs; per the perf review this is
    # an audit item -- if a bundle dump shows the M=1 weight reload eating MXU
    # slot time, replace with a VPU multiply + lane reduction.)
    row = jax.lax.dot_general(
        w4r_ref[...], h.astype(cd),
        dimension_numbers=(((1,), (1,)), ((), ())),
        preferred_element_type=jnp.float32)
    o_ref[...] = row + b4_ref[...]        # (1, 1) bias broadcasts over (1, tb)


def _choose_tile(B, tb):
    """Lane-aligned batch tile; force G >= 2 when there is enough work so a
    v7x megacore can shard the 'parallel' axis across both TensorCores."""
    tb_eff = _round_up(min(tb, _round_up(B, 128)), 128)
    if B > 256 and _cdiv(B, tb_eff) == 1:
        tb_eff = _round_up(_cdiv(B, 2), 128)
    return tb_eff


def density_surrogate_forward(x, params, *, tb=4096,
                              compute_dtype=jnp.bfloat16,
                              vmem_limit_bytes=48 * 1024 * 1024):
    """Forward pass of DensitySurrogate.

    x: (B, input_dim) float32.  Weights stored as (in, out); biases as (1, out).
    Any batch size is accepted (ragged tail handled by block-boundary masking).
    """
    (w1, b1), (w2, b2), (w3, b3), (w4, b4) = params
    B, D = x.shape

    tb_eff = _choose_tile(B, tb)
    G = _cdiv(B, tb_eff)

    cd = compute_dtype
    # Weight casts are tiny one-off ops; x stays f32 and is cast in-kernel.
    w1c, w2c, w3c = w1.astype(cd), w2.astype(cd), w3.astype(cd)
    w4r = w4.T.astype(cd)                        # (1, 32): PyTorch (out, in) layout
    b1f = b1.astype(jnp.float32)                 # (1, 128)
    b2f = b2.astype(jnp.float32)                 # (1, 64)
    b3f = b3.astype(jnp.float32)                 # (1, 32)
    b4f = b4.reshape(1, 1).astype(jnp.float32)   # (1, 1)

    flops = 2 * B * (D * 128 + 128 * 64 + 64 * 32 + 32 * 1)
    bytes_accessed = int(
        int(x.size) * 4
        + sum(int(a.size) * 4 for pair in params for a in pair)
        + B * 4)

    const = lambda shape: pl.BlockSpec(shape, lambda i: (0, 0))

    out_rows = pl.pallas_call(
        mlp_kernel,
        out_shape=jax.ShapeDtypeStruct((G, tb_eff), jnp.float32),
        grid=(G,),
        in_specs=[
            pl.BlockSpec((tb_eff, D), lambda i: (i, 0)),   # x tile (ragged tail OK)
            const((D, 128)), const((1, 128)),
            const((128, 64)), const((1, 64)),
            const((64, 32)), const((1, 32)),
            const((1, 32)), const((1, 1)),
        ],
        out_specs=pl.BlockSpec((1, tb_eff), lambda i: (i, 0)),  # lane-dense row
        compiler_params=pltpu.CompilerParams(
            dimension_semantics=("parallel",),
            vmem_limit_bytes=vmem_limit_bytes),
        cost_estimate=pl.CostEstimate(
            flops=flops, transcendentals=0, bytes_accessed=bytes_accessed),
    )(x, w1c, b1f, w2c, b2f, w3c, b3f, w4r, b4f)

    # (G, tb) -> (Bp,) -> (B, 1): slice off the out-of-bounds tail entries.
    return out_rows.reshape(-1)[:B].reshape(B, 1)


def init_params(key, input_dim):
    """Deterministic init matching the PyTorch module's shapes.
    Weights stored as (in, out); biases as (1, out)."""
    dims = [(input_dim, 128), (128, 64), (64, 32), (32, 1)]
    params = []
    for i, (fan_in, fan_out) in enumerate(dims):
        kw, kb = jax.random.split(jax.random.fold_in(key, i))
        bound = 1.0 / jnp.sqrt(jnp.float32(fan_in))
        w = jax.random.uniform(kw, (fan_in, fan_out), jnp.float32, -bound, bound)
        b = jax.random.uniform(kb, (1, fan_out), jnp.float32, -bound, bound)
        params.append((w, b))
    return params


def reference_forward(x, params):
    """Plain-JAX reference of the same MLP (f32)."""
    h = x
    for i, (w, b) in enumerate(params):
        h = h @ w + b
        if i < len(params) - 1:
            h = jnp.maximum(h, 0.0)
    return h


if __name__ == "__main__":
    key = jax.random.PRNGKey(0)
    input_dim = 16
    params = init_params(key, input_dim)

    # 1) Small batch, default bf16 operand path (f32 accumulation) -> loose tol.
    x_small = jax.random.normal(jax.random.fold_in(key, 100),
                                (8, input_dim), jnp.float32)
    out_bf = jax.block_until_ready(density_surrogate_forward(x_small, params))
    ref_small = reference_forward(x_small, params)
    assert out_bf.shape == (8, 1)
    assert jnp.allclose(out_bf, ref_small, atol=1e-1, rtol=1e-1), (
        f"bf16 mismatch: max abs err = {jnp.max(jnp.abs(out_bf - ref_small))}")

    # 2) Same batch, f32 operands: exact comparison against the reference.
    out_f32 = jax.block_until_ready(
        density_surrogate_forward(x_small, params, compute_dtype=jnp.float32))
    assert jnp.allclose(out_f32, ref_small, atol=1e-5, rtol=1e-5), (
        f"f32 mismatch: max abs err = {jnp.max(jnp.abs(out_f32 - ref_small))}")

    # 3) Ragged batch (no wrapper pad): multi-step grid + partial final block.
    x_mid = jax.random.normal(jax.random.fold_in(key, 101),
                              (300, input_dim), jnp.float32)
    out_mid = jax.block_until_ready(
        density_surrogate_forward(x_mid, params, tb=128,
                                  compute_dtype=jnp.float32))
    ref_mid = reference_forward(x_mid, params)
    assert out_mid.shape == (300, 1)
    assert jnp.allclose(out_mid, ref_mid, atol=1e-5, rtol=1e-5), (
        f"ragged-grid mismatch: max abs err = {jnp.max(jnp.abs(out_mid - ref_mid))}")

    # 4) Batch large enough to trigger the G >= 2 megacore split (512 -> 2x256).
    x_big = jax.random.normal(jax.random.fold_in(key, 102),
                              (512, input_dim), jnp.float32)
    out_big = jax.block_until_ready(
        density_surrogate_forward(x_big, params, compute_dtype=jnp.float32))
    ref_big = reference_forward(x_big, params)
    assert out_big.shape == (512, 1)
    assert jnp.allclose(out_big, ref_big, atol=1e-5, rtol=1e-5), (
        f"split-grid mismatch: max abs err = {jnp.max(jnp.abs(out_big - ref_big))}")

    print("KERNEL_OK")
</pallas_src>

<mosaic_0001>
module attributes {stable_mosaic.version = 11 : i64} {
  func.func @mlp_kernel(%arg0: i32, %arg1: memref<128x16xf32, #tpu.memory_space<vmem>>, %arg2: memref<16x128xbf16, #tpu.memory_space<vmem>>, %arg3: memref<1x128xf32, #tpu.memory_space<vmem>>, %arg4: memref<128x64xbf16, #tpu.memory_space<vmem>>, %arg5: memref<1x64xf32, #tpu.memory_space<vmem>>, %arg6: memref<64x32xbf16, #tpu.memory_space<vmem>>, %arg7: memref<1x32xf32, #tpu.memory_space<vmem>>, %arg8: memref<1x32xbf16, #tpu.memory_space<vmem>>, %arg9: memref<1x1xf32, #tpu.memory_space<vmem>>, %arg10: memref<1x128xf32, #tpu.memory_space<vmem>>) attributes {dimension_semantics = [#tpu.dimension_semantics<parallel>], iteration_bounds = array<i64: 1>, scalar_prefetch = 0 : i64, scratch_operands = 0 : i64, tpu.core_type = #tpu.core_type<tc>, window_params = [{transform_indices = @transform_0, window_bounds = array<i64: 128, 16>}, {pipeline_mode = #tpu.pipeline_mode<synchronous>, transform_indices = @transform_1, window_bounds = array<i64: 16, 128>}, {pipeline_mode = #tpu.pipeline_mode<synchronous>, transform_indices = @transform_2, window_bounds = array<i64: 1, 128>}, {pipeline_mode = #tpu.pipeline_mode<synchronous>, transform_indices = @transform_3, window_bounds = array<i64: 128, 64>}, {pipeline_mode = #tpu.pipeline_mode<synchronous>, transform_indices = @transform_4, window_bounds = array<i64: 1, 64>}, {pipeline_mode = #tpu.pipeline_mode<synchronous>, transform_indices = @transform_5, window_bounds = array<i64: 64, 32>}, {pipeline_mode = #tpu.pipeline_mode<synchronous>, transform_indices = @transform_6, window_bounds = array<i64: 1, 32>}, {pipeline_mode = #tpu.pipeline_mode<synchronous>, transform_indices = @transform_7, window_bounds = array<i64: 1, 32>}, {pipeline_mode = #tpu.pipeline_mode<synchronous>, transform_indices = @transform_8, window_bounds = array<i64: 1, 1>}, {transform_indices = @transform_9, window_bounds = array<i64: 1, 128>}]} {
    %c0 = arith.constant 0 : index
    %c0_0 = arith.constant 0 : index
    %0 = vector.load %arg1[%c0, %c0_0] : memref<128x16xf32, #tpu.memory_space<vmem>>, vector<128x16xf32>
    %1 = arith.truncf %0 : vector<128x16xf32> to vector<128x16xbf16>
    %c0_1 = arith.constant 0 : index
    %c0_2 = arith.constant 0 : index
    %2 = vector.load %arg2[%c0_1, %c0_2] : memref<16x128xbf16, #tpu.memory_space<vmem>>, vector<16x128xbf16>
    %cst = arith.constant dense<0.000000e+00> : vector<128x128xf32>
    %3 = tpu.matmul %1, %2, %cst {dimension_numbers = #tpu.dot_dimension_numbers<[1], [0], [0], [1], [0, 0, 1, 1], [], []>} : vector<128x16xbf16>, vector<16x128xbf16>, vector<128x128xf32> -> vector<128x128xf32>
    %c0_3 = arith.constant 0 : index
    %c0_4 = arith.constant 0 : index
    %4 = vector.load %arg3[%c0_3, %c0_4] : memref<1x128xf32, #tpu.memory_space<vmem>>, vector<1x128xf32>
    %5 = vector.broadcast %4 : vector<1x128xf32> to vector<128x128xf32>
    %6 = arith.addf %3, %5 : vector<128x128xf32>
    %cst_5 = arith.constant 0.000000e+00 : f32
    %7 = vector.broadcast %cst_5 : f32 to vector<128x128xf32>
    %8 = arith.maximumf %6, %7 : vector<128x128xf32>
    %9 = arith.truncf %8 : vector<128x128xf32> to vector<128x128xbf16>
    %c0_6 = arith.constant 0 : index
    %c0_7 = arith.constant 0 : index
    %10 = vector.load %arg4[%c0_6, %c0_7] : memref<128x64xbf16, #tpu.memory_space<vmem>>, vector<128x64xbf16>
    %cst_8 = arith.constant dense<0.000000e+00> : vector<128x64xf32>
    %11 = tpu.matmul %9, %10, %cst_8 {dimension_numbers = #tpu.dot_dimension_numbers<[1], [0], [0], [1], [0, 0, 1, 1], [], []>} : vector<128x128xbf16>, vector<128x64xbf16>, vector<128x64xf32> -> vector<128x64xf32>
    %c0_9 = arith.constant 0 : index
    %c0_10 = arith.constant 0 : index
    %12 = vector.load %arg5[%c0_9, %c0_10] : memref<1x64xf32, #tpu.memory_space<vmem>>, vector<1x64xf32>
    %13 = vector.broadcast %12 : vector<1x64xf32> to vector<128x64xf32>
    %14 = arith.addf %11, %13 : vector<128x64xf32>
    %cst_11 = arith.constant 0.000000e+00 : f32
    %15 = vector.broadcast %cst_11 : f32 to vector<128x64xf32>
    %16 = arith.maximumf %14, %15 : vector<128x64xf32>
    %17 = arith.truncf %16 : vector<128x64xf32> to vector<128x64xbf16>
    %c0_12 = arith.constant 0 : index
    %c0_13 = arith.constant 0 : index
    %18 = vector.load %arg6[%c0_12, %c0_13] : memref<64x32xbf16, #tpu.memory_space<vmem>>, vector<64x32xbf16>
    %cst_14 = arith.constant dense<0.000000e+00> : vector<128x32xf32>
    %19 = tpu.matmul %17, %18, %cst_14 {dimension_numbers = #tpu.dot_dimension_numbers<[1], [0], [0], [1], [0, 0, 1, 1], [], []>} : vector<128x64xbf16>, vector<64x32xbf16>, vector<128x32xf32> -> vector<128x32xf32>
    %c0_15 = arith.constant 0 : index
    %c0_16 = arith.constant 0 : index
    %20 = vector.load %arg7[%c0_15, %c0_16] : memref<1x32xf32, #tpu.memory_space<vmem>>, vector<1x32xf32>
    %21 = vector.broadcast %20 : vector<1x32xf32> to vector<128x32xf32>
    %22 = arith.addf %19, %21 : vector<128x32xf32>
    %cst_17 = arith.constant 0.000000e+00 : f32
    %23 = vector.broadcast %cst_17 : f32 to vector<128x32xf32>
    %24 = arith.maximumf %22, %23 : vector<128x32xf32>
    %c0_18 = arith.constant 0 : index
    %c0_19 = arith.constant 0 : index
    %25 = vector.load %arg8[%c0_18, %c0_19] : memref<1x32xbf16, #tpu.memory_space<vmem>>, vector<1x32xbf16>
    %26 = arith.truncf %24 : vector<128x32xf32> to vector<128x32xbf16>
    %cst_20 = arith.constant dense<0.000000e+00> : vector<1x128xf32>
    %27 = tpu.matmul %25, %26, %cst_20 {dimension_numbers = #tpu.dot_dimension_numbers<[1], [1], [0], [0], [0, 0, 1, 0], [], []>} : vector<1x32xbf16>, vector<128x32xbf16>, vector<1x128xf32> -> vector<1x128xf32>
    %c0_21 = arith.constant 0 : index
    %c0_22 = arith.constant 0 : index
    %28 = vector.load %arg9[%c0_21, %c0_22] : memref<1x1xf32, #tpu.memory_space<vmem>>, vector<1x1xf32>
    %29 = vector.broadcast %28 : vector<1x1xf32> to vector<1x128xf32>
    %30 = arith.addf %27, %29 : vector<1x128xf32>
    %c0_23 = arith.constant 0 : index
    %c0_24 = arith.constant 0 : index
    %31 = vector.load %arg10[%c0_23, %c0_24] : memref<1x128xf32, #tpu.memory_space<vmem>>, vector<1x128xf32>
    tpu.vector_store %arg10[%c0_23, %c0_24], %30 {strides = array<i32>} : memref<1x128xf32, #tpu.memory_space<vmem>>, vector<1x128xf32>,
    return
  }
  func.func @transform_0(%arg0: i32) -> (i32, i32) {
    %c0_i32 = arith.constant 0 : i32
    %c0_i32_0 = arith.constant 0 : i32
    return %arg0, %c0_i32 : i32, i32
  }
  func.func @transform_1(%arg0: i32) -> (i32, i32) {
    %c0_i32 = arith.constant 0 : i32
    %c0_i32_0 = arith.constant 0 : i32
    %c0_i32_1 = arith.constant 0 : i32
    return %c0_i32, %c0_i32_0 : i32, i32
  }
  func.func @transform_2(%arg0: i32) -> (i32, i32) {
    %c0_i32 = arith.constant 0 : i32
    %c0_i32_0 = arith.constant 0 : i32
    %c0_i32_1 = arith.constant 0 : i32
    return %c0_i32, %c0_i32_0 : i32, i32
  }
  func.func @transform_3(%arg0: i32) -> (i32, i32) {
    %c0_i32 = arith.constant 0 : i32
    %c0_i32_0 = arith.constant 0 : i32
    %c0_i32_1 = arith.constant 0 : i32
    return %c0_i32, %c0_i32_0 : i32, i32
  }
  func.func @transform_4(%arg0: i32) -> (i32, i32) {
    %c0_i32 = arith.constant 0 : i32
    %c0_i32_0 = arith.constant 0 : i32
    %c0_i32_1 = arith.constant 0 : i32
    return %c0_i32, %c0_i32_0 : i32, i32
  }
  func.func @transform_5(%arg0: i32) -> (i32, i32) {
    %c0_i32 = arith.constant 0 : i32
    %c0_i32_0 = arith.constant 0 : i32
    %c0_i32_1 = arith.constant 0 : i32
    return %c0_i32, %c0_i32_0 : i32, i32
  }
  func.func @transform_6(%arg0: i32) -> (i32, i32) {
    %c0_i32 = arith.constant 0 : i32
    %c0_i32_0 = arith.constant 0 : i32
    %c0_i32_1 = arith.constant 0 : i32
    return %c0_i32, %c0_i32_0 : i32, i32
  }
  func.func @transform_7(%arg0: i32) -> (i32, i32) {
    %c0_i32 = arith.constant 0 : i32
    %c0_i32_0 = arith.constant 0 : i32
    %c0_i32_1 = arith.constant 0 : i32
    return %c0_i32, %c0_i32_0 : i32, i32
  }
  func.func @transform_8(%arg0: i32) -> (i32, i32) {
    %c0_i32 = arith.constant 0 : i32
    %c0_i32_0 = arith.constant 0 : i32
    %c0_i32_1 = arith.constant 0 : i32
    return %c0_i32, %c0_i32_0 : i32, i32
  }
  func.func @transform_9(%arg0: i32) -> (i32, i32) {
    %c0_i32 = arith.constant 0 : i32
    %c0_i32_0 = arith.constant 0 : i32
    return %arg0, %c0_i32 : i32, i32
  }
}

</mosaic_0001>

<llo_original>
// kernel: tpu_custom_call.1
$region0: #{tpu_custom_call.1}
  #allocation0 [shape = 'u32[]', space=smem, size = 0x4, offset = 0x4, fixed_abs, tag = 'smem constant byte address 0x4 - core index']
  #allocation1 [shape = 'u32[144,128]{1,0:T(1,128)}', space=vmem, size = 0x12000, scoped, tag = 'internal scratch']
  #allocation2 [shape = 'f32[1,1]{1,0:T(1,128)S(1)}', space=vmem, size = 0x200, scoped, tag = 'scoped memory for tpu_custom_call.1']
  %s0 = inlined_call_operand.vmem [shape: f32[8,16], index: 0, kind: input, shape index: {}]
  %s1 = inlined_call_operand.vmem [shape: bf16[16,128], index: 1, kind: input, shape index: {}]
  %s2 = inlined_call_operand.vmem [shape: f32[1,128], index: 2, kind: input, shape index: {}]
  %s3 = inlined_call_operand.vmem [shape: bf16[128,64], index: 3, kind: input, shape index: {}]
  %s4 = inlined_call_operand.vmem [shape: f32[1,64], index: 4, kind: input, shape index: {}]
  %s5 = inlined_call_operand.vmem [shape: bf16[64,32], index: 5, kind: input, shape index: {}]
  %s6 = inlined_call_operand.vmem [shape: f32[1,32], index: 6, kind: input, shape index: {}]
  %s7 = inlined_call_operand.vmem [shape: bf16[1,32], index: 7, kind: input, shape index: {}]
  %s8 = inlined_call_operand.<no memory space> [shape: f32[1,1], index: 8, kind: input, shape index: {}]
  %s9 = inlined_call_operand.hbm [shape: f32[1,128], index: 9, kind: output, shape index: {}]
  %s10 = sld [smem:[#allocation0]]
  $region46: #{tpu_custom_call.1} parent=0
    _
  %s12 = ssub.s32 1, %s10
  %s13 = scalar_select 0, %s12, %s10
  %v14 = vstv %s8
  %15 = vst [vmem:[#allocation2] sm:$0x1] %v14
  $region1: #{tpu_custom_call.1} parent=0
    #allocation3 [shape = 'u8[512]{0}', space=vmem, size = 0x400, scoped, tag = 'output window, operand 0, single buffered']
    #allocation4 [shape = 's32[1]{0}', space=sflag, size = 0x4, scoped, tag = 'scoped memory for tpu_custom_call.1']
    %16 = vsyncpa [#allocation4], 0
    // Predicated region
    $region2: #{tpu_custom_call.1} parent=1 // pred_check
      _
    $region3: #{tpu_custom_call.1} parent=1 // pred_check_branch
      %18 = sbr.rel (0) target = $region5
    $region4: #{tpu_custom_call.1} parent=1 // pred_region
      _
    $region5: #{tpu_custom_call.1} parent=1 // pred_fallthru
      _
    // Predicated region
    $region6: #{tpu_custom_call.1} parent=1 // pred_check
      _
    $region7: #{tpu_custom_call.1} parent=1 // pred_check_branch
      %20 = sbr.rel (0) target = $region9
    $region8: #{tpu_custom_call.1} parent=1 // pred_region
      _
    $region9: #{tpu_custom_call.1} parent=1 // pred_fallthru
      _
    // Predicated region
    $region10: #{tpu_custom_call.1} parent=1 // pred_check
      _
    $region11: #{tpu_custom_call.1} parent=1 // pred_check_branch
      %22 = sbr.rel (0) target = $region13
    $region12: #{tpu_custom_call.1} parent=1 // pred_region
      _
    $region13: #{tpu_custom_call.1} parent=1 // pred_fallthru
      _
    // Predicated region
    $region14: #{tpu_custom_call.1} parent=1 // pred_check
      _
    $region15: #{tpu_custom_call.1} parent=1 // pred_check_branch
      %24 = sbr.rel (0) target = $region17
    $region16: #{tpu_custom_call.1} parent=1 // pred_region
      _
    $region17: #{tpu_custom_call.1} parent=1 // pred_fallthru
      _
    // Predicated region
    $region18: #{tpu_custom_call.1} parent=1 // pred_check
      _
    $region19: #{tpu_custom_call.1} parent=1 // pred_check_branch
      %26 = sbr.rel (0) target = $region21
    $region20: #{tpu_custom_call.1} parent=1 // pred_region
      _
    $region21: #{tpu_custom_call.1} parent=1 // pred_fallthru
      _
    // Predicated region
    $region22: #{tpu_custom_call.1} parent=1 // pred_check
      _
    $region23: #{tpu_custom_call.1} parent=1 // pred_check_branch
      %28 = sbr.rel (0) target = $region25
    $region24: #{tpu_custom_call.1} parent=1 // pred_region
      _
    $region25: #{tpu_custom_call.1} parent=1 // pred_fallthru
      _
    // Predicated region
    $region26: #{tpu_custom_call.1} parent=1 // pred_check
      _
    $region27: #{tpu_custom_call.1} parent=1 // pred_check_branch
      %30 = sbr.rel (0) target = $region29
    $region28: #{tpu_custom_call.1} parent=1 // pred_region
      _
    $region29: #{tpu_custom_call.1} parent=1 // pred_fallthru
      _
    // Predicated region
    $region30: #{tpu_custom_call.1} parent=1 // pred_check
      _
    $region31: #{tpu_custom_call.1} parent=1 // pred_check_branch
      %32 = sbr.rel (0) target = $region33
    $region32: #{tpu_custom_call.1} parent=1 // pred_region
      _
    $region33: #{tpu_custom_call.1} parent=1 // pred_fallthru
      _
    // Predicated region
    $region34: #{tpu_custom_call.1} parent=1 // pred_check
      _
    $region35: #{tpu_custom_call.1} parent=1 // pred_check_branch
      %34 = sbr.rel (0) target = $region37
    $region36: #{tpu_custom_call.1} parent=1 // pred_region
      _
    $region37: #{tpu_custom_call.1} parent=1 // pred_fallthru
      _
    %v36 = vld [vmem:[%s0] sm:$0xff]
    %v37 = vld [vmem:[%s0 + $0x8] sm:$0xff]
    %v38 = vld [vmem:[%s0 + $0x10] sm:$0xff]
    %v39 = vld [vmem:[%s0 + $0x18] sm:$0xff]
    %v40 = vld [vmem:[%s0 + $0x20] sm:$0xff]
    %v41 = vld [vmem:[%s0 + $0x28] sm:$0xff]
    %v42 = vld [vmem:[%s0 + $0x30] sm:$0xff]
    %v43 = vld [vmem:[%s0 + $0x38] sm:$0xff]
    %v44 = vld [vmem:[%s0 + $0x40] sm:$0xff]
    %v45 = vld [vmem:[%s0 + $0x48] sm:$0xff]
    %v46 = vld [vmem:[%s0 + $0x50] sm:$0xff]
    %v47 = vld [vmem:[%s0 + $0x58] sm:$0xff]
    %v48 = vld [vmem:[%s0 + $0x60] sm:$0xff]
    %v49 = vld [vmem:[%s0 + $0x68] sm:$0xff]
    %v50 = vld [vmem:[%s0 + $0x70] sm:$0xff]
    %v51 = vld [vmem:[%s0 + $0x78] sm:$0xff]
    %v52 = vpack.c.bf16 %v37, %v36
    %v53 = vpack.c.bf16 %v39, %v38
    %v54 = vpack.c.bf16 %v41, %v40
    %v55 = vpack.c.bf16 %v43, %v42
    %v56 = vpack.c.bf16 %v45, %v44
    %v57 = vpack.c.bf16 %v47, %v46
    %v58 = vpack.c.bf16 %v49, %v48
    %v59 = vpack.c.bf16 %v51, %v50
    %v60 = vld [vmem:[%s1] sm:$0xf]
    %v61 = vld [vmem:[%s1 + $0x4] sm:$0xf]
    %v62 = vld [vmem:[%s2] sm:$0x1]
    %v64 = vlaneseq
    %v65 = vshrl.u32 %v64, 7
    %v66 = vsub.s32 0, %v65
    %v67 = vrot.slane %v62, %v66
    %v71 = vunpack.c.l.b16 %v60
    %v72 = vunpack.c.l.b16 %v61
    %v73 = vpack.c.b16 %v72, %v71
    %vm75 = vcmask 130048
    %v77 = vsel %vm75, %v52, 0
    %v80 = vsel %vm75, %v53, 0
    %v83 = vsel %vm75, %v54, 0
    %v86 = vsel %vm75, %v55, 0
    %v89 = vsel %vm75, %v56, 0
    %v92 = vsel %vm75, %v57, 0
    %v95 = vsel %vm75, %v58, 0
    %v98 = vsel %vm75, %v59, 0
    %100 = vmatprep.subr.bf16.mxu0 0
    %101 = vmatpush1.bf16.msra.mxu0 0
    %102 = vmatprep.subr.bf16.mxu0 0
    %103 = vmatpush1.bf16.msra.mxu0 0
    %104 = vmatprep.subr.bf16.mxu0 0
    %105 = vmatpush1.bf16.msra.mxu0 0
    %106 = vmatprep.subr.bf16.mxu0 0
    %107 = vmatpush1.bf16.msra.mxu0 0
    %108 = vmatprep.subr.bf16.mxu0 0
    %109 = vmatpush1.bf16.msra.mxu0 0
    %110 = vmatprep.subr.bf16.mxu0 0
    %111 = vmatpush1.bf16.msra.mxu0 0
    %112 = vmatprep.subr.bf16.mxu0 0
    %113 = vmatpush1.bf16.msra.mxu0 0
    %114 = vmatprep.subr.bf16.mxu0 0
    %115 = vmatpush1.bf16.msra.mxu0 %v73
    %116 = vmatprep.subr.bf16.mxu0 0
    %117 = vmatpush2.bf16.msra.mxu0 0
    %118 = vmatprep.subr.bf16.mxu0 0
    %119 = vmatpush2.bf16.msra.mxu0 0
    %120 = vmatprep.subr.bf16.mxu0 0
    %121 = vmatpush2.bf16.msra.mxu0 0
    %122 = vmatprep.subr.bf16.mxu0 0
    %123 = vmatpush2.bf16.msra.mxu0 0
    %124 = vmatprep.subr.bf16.mxu0 0
    %125 = vmatpush2.bf16.msra.mxu0 0
    %126 = vmatprep.subr.bf16.mxu0 0
    %127 = vmatpush2.bf16.msra.mxu0 0
    %128 = vmatprep.subr.bf16.mxu0 0
    %129 = vmatpush2.bf16.msra.mxu0 0
    %130 = vmatprep.subr.bf16.mxu0 0
    %131 = vmatpush2.bf16.msra.mxu0 0
    %132 = vmatprep.mubr.bf16.mxu0 0
    %133 = vmatmul.mubr.bf16.gmra.mxu0 %v77
    %v134 = vpop.f32.mrf.mxu0
    %v135 = vadd.f32 %v67, %v134
    %v136 = vpop.f32.mrf.mxu0
    %v137 = vpop.f32.mrf.mxu0
    %v138 = vadd.f32 %v67, %v137
    %v139 = vpop.f32.mrf.mxu0
    %140 = vmatprep.mubr.bf16.mxu0 0
    %141 = vmatmul.mubr.bf16.gmra.mxu0 %v80
    %v142 = vpop.f32.mrf.mxu0
    %v143 = vadd.f32 %v67, %v142
    %v144 = vpop.f32.mrf.mxu0
    %v145 = vpop.f32.mrf.mxu0
    %v146 = vadd.f32 %v67, %v145
    %v147 = vpop.f32.mrf.mxu0
    %148 = vmatprep.mubr.bf16.mxu0 0
    %149 = vmatmul.mubr.bf16.gmra.mxu0 %v83
    %v150 = vpop.f32.mrf.mxu0
    %v151 = vadd.f32 %v67, %v150
    %v152 = vpop.f32.mrf.mxu0
    %v153 = vpop.f32.mrf.mxu0
    %v154 = vadd.f32 %v67, %v153
    %v155 = vpop.f32.mrf.mxu0
    %156 = vmatprep.mubr.bf16.mxu0 0
    %157 = vmatmul.mubr.bf16.gmra.mxu0 %v86
    %v158 = vpop.f32.mrf.mxu0
    %v159 = vadd.f32 %v67, %v158
    %v160 = vpop.f32.mrf.mxu0
    %v161 = vpop.f32.mrf.mxu0
    %v162 = vadd.f32 %v67, %v161
    %v163 = vpop.f32.mrf.mxu0
    %164 = vmatprep.mubr.bf16.mxu0 0
    %165 = vmatmul.mubr.bf16.gmra.mxu0 %v89
    %v166 = vpop.f32.mrf.mxu0
    %v167 = vadd.f32 %v67, %v166
    %v168 = vpop.f32.mrf.mxu0
    %v169 = vpop.f32.mrf.mxu0
    %v170 = vadd.f32 %v67, %v169
    %v171 = vpop.f32.mrf.mxu0
    %172 = vmatprep.mubr.bf16.mxu0 0
    %173 = vmatmul.mubr.bf16.gmra.mxu0 %v92
    %v174 = vpop.f32.mrf.mxu0
    %v175 = vadd.f32 %v67, %v174
    %v176 = vpop.f32.mrf.mxu0
    %v177 = vpop.f32.mrf.mxu0
    %v178 = vadd.f32 %v67, %v177
    %v179 = vpop.f32.mrf.mxu0
    %180 = vmatprep.mubr.bf16.mxu0 0
    %181 = vmatmul.mubr.bf16.gmra.mxu0 %v95
    %v182 = vpop.f32.mrf.mxu0
    %v183 = vadd.f32 %v67, %v182
    %v184 = vpop.f32.mrf.mxu0
    %v185 = vpop.f32.mrf.mxu0
    %v186 = vadd.f32 %v67, %v185
    %v187 = vpop.f32.mrf.mxu0
    %188 = vmatprep.mubr.bf16.mxu0 0
    %189 = vmatmul.mubr.bf16.gmra.mxu0 %v98
    %v190 = vpop.f32.mrf.mxu0
    %v191 = vadd.f32 %v67, %v190
    %v192 = vpop.f32.mrf.mxu0
    %v193 = vpop.f32.mrf.mxu0
    %v194 = vadd.f32 %v67, %v193
    %v195 = vpop.f32.mrf.mxu0
    %196 = vdwg.mxu0
    %v197 = vmax.f32 %v135, 0.0
    %v198 = vmax.f32 %v138, 0.0
    %v199 = vmax.f32 %v143, 0.0
    %v200 = vmax.f32 %v146, 0.0
    %v201 = vmax.f32 %v151, 0.0
    %v202 = vmax.f32 %v154, 0.0
    %v203 = vmax.f32 %v159, 0.0
    %v204 = vmax.f32 %v162, 0.0
    %v205 = vmax.f32 %v167, 0.0
    %v206 = vmax.f32 %v170, 0.0
    %v207 = vmax.f32 %v175, 0.0
    %v208 = vmax.f32 %v178, 0.0
    %v209 = vmax.f32 %v183, 0.0
    %v210 = vmax.f32 %v186, 0.0
    %v211 = vmax.f32 %v191, 0.0
    %v212 = vmax.f32 %v194, 0.0
    %v213 = vpack.c.bf16 %v198, %v197
    %v214 = vpack.c.bf16 %v200, %v199
    %v215 = vpack.c.bf16 %v202, %v201
    %v216 = vpack.c.bf16 %v204, %v203
    %v217 = vpack.c.bf16 %v206, %v205
    %v218 = vpack.c.bf16 %v208, %v207
    %v219 = vpack.c.bf16 %v210, %v209
    %v220 = vpack.c.bf16 %v212, %v211
    %v221 = vld [vmem:[%s3] sm:$0xf]
    %v222 = vld [vmem:[%s3 + $0x4] sm:$0xf]
    %v223 = vld [vmem:[%s3 + $0x8] sm:$0xf]
    %v224 = vld [vmem:[%s3 + $0xc] sm:$0xf]
    %v225 = vld [vmem:[%s3 + $0x10] sm:$0xf]
    %v226 = vld [vmem:[%s3 + $0x14] sm:$0xf]
    %v227 = vld [vmem:[%s3 + $0x18] sm:$0xf]
    %v228 = vld [vmem:[%s3 + $0x1c] sm:$0xf]
    %v229 = vld [vmem:[%s3 + $0x20] sm:$0xf]
    %v230 = vld [vmem:[%s3 + $0x24] sm:$0xf]
    %v231 = vld [vmem:[%s3 + $0x28] sm:$0xf]
    %v232 = vld [vmem:[%s3 + $0x2c] sm:$0xf]
    %v233 = vld [vmem:[%s3 + $0x30] sm:$0xf]
    %v234 = vld [vmem:[%s3 + $0x34] sm:$0xf]
    %v235 = vld [vmem:[%s3 + $0x38] sm:$0xf]
    %v236 = vld [vmem:[%s3 + $0x3c] sm:$0xf]
    %v237 = vld [vmem:[%s4] sm:$0x1]
    %v239 = vlaneseq
    %v240 = vshrl.u32 %v239, 7
    %v241 = vsub.s32 0, %v240
    %v242 = vrot.slane %v237, %v241
    %v260 = vunpack.c.l.b16 %v221
    %v261 = vunpack.c.l.b16 %v222
    %v262 = vunpack.c.l.b16 %v223
    %v263 = vunpack.c.l.b16 %v224
    %v264 = vunpack.c.l.b16 %v225
    %v265 = vunpack.c.l.b16 %v226
    %v266 = vunpack.c.l.b16 %v227
    %v267 = vunpack.c.l.b16 %v228
    %v268 = vunpack.c.l.b16 %v229
    %v269 = vunpack.c.l.b16 %v230
    %v270 = vunpack.c.l.b16 %v231
    %v271 = vunpack.c.l.b16 %v232
    %v272 = vunpack.c.l.b16 %v233
    %v273 = vunpack.c.l.b16 %v234
    %v274 = vunpack.c.l.b16 %v235
    %v275 = vunpack.c.l.b16 %v236
    %v276 = vpack.c.b16 %v261, %v260
    %v277 = vpack.c.b16 %v263, %v262
    %v278 = vpack.c.b16 %v265, %v264
    %v279 = vpack.c.b16 %v267, %v266
    %v280 = vpack.c.b16 %v269, %v268
    %v281 = vpack.c.b16 %v271, %v270
    %v282 = vpack.c.b16 %v273, %v272
    %v283 = vpack.c.b16 %v275, %v274
    %292 = vmatprep.subr.bf16.mxu0 0
    %293 = vmatpush1.bf16.msra.mxu0 %v283
    %294 = vmatprep.subr.bf16.mxu0 0
    %295 = vmatpush1.bf16.msra.mxu0 %v282
    %296 = vmatprep.subr.bf16.mxu0 0
    %297 = vmatpush1.bf16.msra.mxu0 %v281
    %298 = vmatprep.subr.bf16.mxu0 0
    %299 = vmatpush1.bf16.msra.mxu0 %v280
    %300 = vmatprep.subr.bf16.mxu0 0
    %301 = vmatpush1.bf16.msra.mxu0 %v279
    %302 = vmatprep.subr.bf16.mxu0 0
    %303 = vmatpush1.bf16.msra.mxu0 %v278
    %304 = vmatprep.subr.bf16.mxu0 0
    %305 = vmatpush1.bf16.msra.mxu0 %v277
    %306 = vmatprep.subr.bf16.mxu0 0
    %307 = vmatpush1.bf16.msra.mxu0 %v276
    %308 = vmatprep.subr.bf16.mxu0 0
    %309 = vmatpush2.bf16.msra.mxu0 0
    %310 = vmatprep.subr.bf16.mxu0 0
    %311 = vmatpush2.bf16.msra.mxu0 0
    %312 = vmatprep.subr.bf16.mxu0 0
    %313 = vmatpush2.bf16.msra.mxu0 0
    %314 = vmatprep.subr.bf16.mxu0 0
    %315 = vmatpush2.bf16.msra.mxu0 0
    %316 = vmatprep.subr.bf16.mxu0 0
    %317 = vmatpush2.bf16.msra.mxu0 0
    %318 = vmatprep.subr.bf16.mxu0 0
    %319 = vmatpush2.bf16.msra.mxu0 0
    %320 = vmatprep.subr.bf16.mxu0 0
    %321 = vmatpush2.bf16.msra.mxu0 0
    %322 = vmatprep.subr.bf16.mxu0 0
    %323 = vmatpush2.bf16.msra.mxu0 0
    %324 = vmatprep.mubr.bf16.mxu0 0
    %325 = vmatmul.mubr.bf16.gmra.mxu0 %v213
    %v326 = vpop.f32.mrf.mxu0
    %v327 = vadd.f32 %v242, %v326
    %v328 = vpop.f32.mrf.mxu0
    %v329 = vpop.f32.mrf.mxu0
    %v330 = vadd.f32 %v242, %v329
    %v331 = vpop.f32.mrf.mxu0
    %332 = vmatprep.mubr.bf16.mxu0 0
    %333 = vmatmul.mubr.bf16.gmra.mxu0 %v214
    %v334 = vpop.f32.mrf.mxu0
    %v335 = vadd.f32 %v242, %v334
    %v336 = vpop.f32.mrf.mxu0
    %v337 = vpop.f32.mrf.mxu0
    %v338 = vadd.f32 %v242, %v337
    %v339 = vpop.f32.mrf.mxu0
    %340 = vmatprep.mubr.bf16.mxu0 0
    %341 = vmatmul.mubr.bf16.gmra.mxu0 %v215
    %v342 = vpop.f32.mrf.mxu0
    %v343 = vadd.f32 %v242, %v342
    %v344 = vpop.f32.mrf.mxu0
    %v345 = vpop.f32.mrf.mxu0
    %v346 = vadd.f32 %v242, %v345
    %v347 = vpop.f32.mrf.mxu0
    %348 = vmatprep.mubr.bf16.mxu0 0
    %349 = vmatmul.mubr.bf16.gmra.mxu0 %v216
    %v350 = vpop.f32.mrf.mxu0
    %v351 = vadd.f32 %v242, %v350
    %v352 = vpop.f32.mrf.mxu0
    %v353 = vpop.f32.mrf.mxu0
    %v354 = vadd.f32 %v242, %v353
    %v355 = vpop.f32.mrf.mxu0
    %356 = vmatprep.mubr.bf16.mxu0 0
    %357 = vmatmul.mubr.bf16.gmra.mxu0 %v217
    %v358 = vpop.f32.mrf.mxu0
    %v359 = vadd.f32 %v242, %v358
    %v360 = vpop.f32.mrf.mxu0
    %v361 = vpop.f32.mrf.mxu0
    %v362 = vadd.f32 %v242, %v361
    %v363 = vpop.f32.mrf.mxu0
    %364 = vmatprep.mubr.bf16.mxu0 0
    %365 = vmatmul.mubr.bf16.gmra.mxu0 %v218
    %v366 = vpop.f32.mrf.mxu0
    %v367 = vadd.f32 %v242, %v366
    %v368 = vpop.f32.mrf.mxu0
    %v369 = vpop.f32.mrf.mxu0
    %v370 = vadd.f32 %v242, %v369
    %v371 = vpop.f32.mrf.mxu0
    %372 = vmatprep.mubr.bf16.mxu0 0
    %373 = vmatmul.mubr.bf16.gmra.mxu0 %v219
    %v374 = vpop.f32.mrf.mxu0
    %v375 = vadd.f32 %v242, %v374
    %v376 = vpop.f32.mrf.mxu0
    %v377 = vpop.f32.mrf.mxu0
    %v378 = vadd.f32 %v242, %v377
    %v379 = vpop.f32.mrf.mxu0
    %380 = vmatprep.mubr.bf16.mxu0 0
    %381 = vmatmul.mubr.bf16.gmra.mxu0 %v220
    %v382 = vpop.f32.mrf.mxu0
    %v383 = vadd.f32 %v242, %v382
    %v384 = vpop.f32.mrf.mxu0
    %v385 = vpop.f32.mrf.mxu0
    %v386 = vadd.f32 %v242, %v385
    %v387 = vpop.f32.mrf.mxu0
    %388 = vdwg.mxu0
    %v389 = vmax.f32 %v327, 0.0
    %v390 = vmax.f32 %v330, 0.0
    %v391 = vmax.f32 %v335, 0.0
    %v392 = vmax.f32 %v338, 0.0
    %v393 = vmax.f32 %v343, 0.0
    %v394 = vmax.f32 %v346, 0.0
    %v395 = vmax.f32 %v351, 0.0
    %v396 = vmax.f32 %v354, 0.0
    %v397 = vmax.f32 %v359, 0.0
    %v398 = vmax.f32 %v362, 0.0
    %v399 = vmax.f32 %v367, 0.0
    %v400 = vmax.f32 %v370, 0.0
    %v401 = vmax.f32 %v375, 0.0
    %v402 = vmax.f32 %v378, 0.0
    %v403 = vmax.f32 %v383, 0.0
    %v404 = vmax.f32 %v386, 0.0
    %v405 = vpack.c.bf16 %v390, %v389
    %v406 = vpack.c.bf16 %v392, %v391
    %v407 = vpack.c.bf16 %v394, %v393
    %v408 = vpack.c.bf16 %v396, %v395
    %v409 = vpack.c.bf16 %v398, %v397
    %v410 = vpack.c.bf16 %v400, %v399
    %v411 = vpack.c.bf16 %v402, %v401
    %v412 = vpack.c.bf16 %v404, %v403
    %v413 = vld [vmem:[%s5] sm:$0xf]
    %v414 = vld [vmem:[%s5 + $0x4] sm:$0xf]
    %v415 = vld [vmem:[%s5 + $0x8] sm:$0xf]
    %v416 = vld [vmem:[%s5 + $0xc] sm:$0xf]
    %v417 = vld [vmem:[%s5 + $0x10] sm:$0xf]
    %v418 = vld [vmem:[%s5 + $0x14] sm:$0xf]
    %v419 = vld [vmem:[%s5 + $0x18] sm:$0xf]
    %v420 = vld [vmem:[%s5 + $0x1c] sm:$0xf]
    %v421 = vld [vmem:[%s6] sm:$0x1]
    %v423 = vlaneseq
    %v424 = vshrl.u32 %v423, 7
    %v425 = vsub.s32 0, %v424
    %v426 = vrot.slane %v421, %v425
    %v436 = vunpack.c.l.b16 %v413
    %v437 = vunpack.c.l.b16 %v414
    %v438 = vunpack.c.l.b16 %v415
    %v439 = vunpack.c.l.b16 %v416
    %v440 = vunpack.c.l.b16 %v417
    %v441 = vunpack.c.l.b16 %v418
    %v442 = vunpack.c.l.b16 %v419
    %v443 = vunpack.c.l.b16 %v420
    %v444 = vpack.c.b16 %v437, %v436
    %v445 = vpack.c.b16 %v439, %v438
    %v446 = vpack.c.b16 %v441, %v440
    %v447 = vpack.c.b16 %v443, %v442
    %vm452 = vcmask 523264
    %v454 = vsel %vm452, %v405, 0
    %v457 = vsel %vm452, %v406, 0
    %v460 = vsel %vm452, %v407, 0
    %v463 = vsel %vm452, %v408, 0
    %v466 = vsel %vm452, %v409, 0
    %v469 = vsel %vm452, %v410, 0
    %v472 = vsel %vm452, %v411, 0
    %v475 = vsel %vm452, %v412, 0
    %477 = vmatprep.subr.bf16.mxu0 0
    %478 = vmatpush1.bf16.msra.mxu0 0
    %479 = vmatprep.subr.bf16.mxu0 0
    %480 = vmatpush1.bf16.msra.mxu0 0
    %481 = vmatprep.subr.bf16.mxu0 0
    %482 = vmatpush1.bf16.msra.mxu0 0
    %483 = vmatprep.subr.bf16.mxu0 0
    %484 = vmatpush1.bf16.msra.mxu0 0
    %485 = vmatprep.subr.bf16.mxu0 0
    %486 = vmatpush1.bf16.msra.mxu0 %v447
    %487 = vmatprep.subr.bf16.mxu0 0
    %488 = vmatpush1.bf16.msra.mxu0 %v446
    %489 = vmatprep.subr.bf16.mxu0 0
    %490 = vmatpush1.bf16.msra.mxu0 %v445
    %491 = vmatprep.subr.bf16.mxu0 0
    %492 = vmatpush1.bf16.msra.mxu0 %v444
    %493 = vmatprep.subr.bf16.mxu0 0
    %494 = vmatpush2.bf16.msra.mxu0 0
    %495 = vmatprep.subr.bf16.mxu0 0
    %496 = vmatpush2.bf16.msra.mxu0 0
    %497 = vmatprep.subr.bf16.mxu0 0
    %498 = vmatpush2.bf16.msra.mxu0 0
    %499 = vmatprep.subr.bf16.mxu0 0
    %500 = vmatpush2.bf16.msra.mxu0 0
    %501 = vmatprep.subr.bf16.mxu0 0
    %502 = vmatpush2.bf16.msra.mxu0 0
    %503 = vmatprep.subr.bf16.mxu0 0
    %504 = vmatpush2.bf16.msra.mxu0 0
    %505 = vmatprep.subr.bf16.mxu0 0
    %506 = vmatpush2.bf16.msra.mxu0 0
    %507 = vmatprep.subr.bf16.mxu0 0
    %508 = vmatpush2.bf16.msra.mxu0 0
    %509 = vmatprep.mubr.bf16.mxu0 0
    %510 = vmatmul.mubr.bf16.gmra.mxu0 %v454
    %v511 = vpop.f32.mrf.mxu0
    %v512 = vadd.f32 %v426, %v511
    %v513 = vpop.f32.mrf.mxu0
    %v514 = vpop.f32.mrf.mxu0
    %v515 = vadd.f32 %v426, %v514
    %v516 = vpop.f32.mrf.mxu0
    %517 = vmatprep.mubr.bf16.mxu0 0
    %518 = vmatmul.mubr.bf16.gmra.mxu0 %v457
    %v519 = vpop.f32.mrf.mxu0
    %v520 = vadd.f32 %v426, %v519
    %v521 = vpop.f32.mrf.mxu0
    %v522 = vpop.f32.mrf.mxu0
    %v523 = vadd.f32 %v426, %v522
    %v524 = vpop.f32.mrf.mxu0
    %525 = vmatprep.mubr.bf16.mxu0 0
    %526 = vmatmul.mubr.bf16.gmra.mxu0 %v460
    %v527 = vpop.f32.mrf.mxu0
    %v528 = vadd.f32 %v426, %v527
    %v529 = vpop.f32.mrf.mxu0
    %v530 = vpop.f32.mrf.mxu0
    %v531 = vadd.f32 %v426, %v530
    %v532 = vpop.f32.mrf.mxu0
    %533 = vmatprep.mubr.bf16.mxu0 0
    %534 = vmatmul.mubr.bf16.gmra.mxu0 %v463
    %v535 = vpop.f32.mrf.mxu0
    %v536 = vadd.f32 %v426, %v535
    %v537 = vpop.f32.mrf.mxu0
    %v538 = vpop.f32.mrf.mxu0
    %v539 = vadd.f32 %v426, %v538
    %v540 = vpop.f32.mrf.mxu0
    %541 = vmatprep.mubr.bf16.mxu0 0
    %542 = vmatmul.mubr.bf16.gmra.mxu0 %v466
    %v543 = vpop.f32.mrf.mxu0
    %v544 = vadd.f32 %v426, %v543
    %v545 = vpop.f32.mrf.mxu0
    %v546 = vpop.f32.mrf.mxu0
    %v547 = vadd.f32 %v426, %v546
    %v548 = vpop.f32.mrf.mxu0
    %549 = vmatprep.mubr.bf16.mxu0 0
    %550 = vmatmul.mubr.bf16.gmra.mxu0 %v469
    %v551 = vpop.f32.mrf.mxu0
    %v552 = vadd.f32 %v426, %v551
    %v553 = vpop.f32.mrf.mxu0
    %v554 = vpop.f32.mrf.mxu0
    %v555 = vadd.f32 %v426, %v554
    %v556 = vpop.f32.mrf.mxu0
    %557 = vmatprep.mubr.bf16.mxu0 0
    %558 = vmatmul.mubr.bf16.gmra.mxu0 %v472
    %v559 = vpop.f32.mrf.mxu0
    %v560 = vadd.f32 %v426, %v559
    %v561 = vpop.f32.mrf.mxu0
    %v562 = vpop.f32.mrf.mxu0
    %v563 = vadd.f32 %v426, %v562
    %v564 = vpop.f32.mrf.mxu0
    %565 = vmatprep.mubr.bf16.mxu0 0
    %566 = vmatmul.mubr.bf16.gmra.mxu0 %v475
    %v567 = vpop.f32.mrf.mxu0
    %v568 = vadd.f32 %v426, %v567
    %v569 = vpop.f32.mrf.mxu0
    %v570 = vpop.f32.mrf.mxu0
    %v571 = vadd.f32 %v426, %v570
    %v572 = vpop.f32.mrf.mxu0
    %573 = vdwg.mxu0
    %v574 = vmax.f32 %v512, 0.0
    %v575 = vmax.f32 %v515, 0.0
    %v576 = vmax.f32 %v520, 0.0
    %v577 = vmax.f32 %v523, 0.0
    %v578 = vmax.f32 %v528, 0.0
    %v579 = vmax.f32 %v531, 0.0
    %v580 = vmax.f32 %v536, 0.0
    %v581 = vmax.f32 %v539, 0.0
    %v582 = vmax.f32 %v544, 0.0
    %v583 = vmax.f32 %v547, 0.0
    %v584 = vmax.f32 %v552, 0.0
    %v585 = vmax.f32 %v555, 0.0
    %v586 = vmax.f32 %v560, 0.0
    %v587 = vmax.f32 %v563, 0.0
    %v588 = vmax.f32 %v568, 0.0
    %v589 = vmax.f32 %v571, 0.0
    %v590 = vld [vmem:[%s7] sm:$0x1]
    %v591 = vpack.c.bf16 %v575, %v574
    %v592 = vpack.c.bf16 %v577, %v576
    %v593 = vpack.c.bf16 %v579, %v578
    %v594 = vpack.c.bf16 %v581, %v580
    %v595 = vpack.c.bf16 %v583, %v582
    %v596 = vpack.c.bf16 %v585, %v584
    %v597 = vpack.c.bf16 %v587, %v586
    %v598 = vpack.c.bf16 %v589, %v588
    %v599 = vld [vmem:[#allocation2] sm:$0x1]
    %601 = vset.pattern.permute.xlu0 0
    %602 = vperm.xlu0 %601, %v599
    %v603 = vpop.permute.xlu0 %602
    %v605 = vlaneseq
    %v606 = vshrl.u32 %v605, 7
    %v607 = vsub.s32 0, %v606
    %v608 = vrot.slane %v603, %v607
    %vm609 = vcmask 261120
    %v611 = vsel %vm609, %v590, 0
    %v614 = vsel %vm609, %v591, 0
    %v617 = vsel %vm609, %v592, 0
    %v620 = vsel %vm609, %v593, 0
    %v623 = vsel %vm609, %v594, 0
    %v626 = vsel %vm609, %v595, 0
    %v629 = vsel %vm609, %v596, 0
    %v632 = vsel %vm609, %v597, 0
    %v635 = vsel %vm609, %v598, 0
    %637 = vmatprep.subr.bf16.mxu0 0
    %638 = vmatpush1.bf16.xpose.msra.mxu0 %v635
    %639 = vmatprep.subr.bf16.mxu0 0
    %640 = vmatpush1.bf16.xpose.msra.mxu0 %v632
    %641 = vmatprep.subr.bf16.mxu0 0
    %642 = vmatpush1.bf16.xpose.msra.mxu0 %v629
    %643 = vmatprep.subr.bf16.mxu0 0
    %644 = vmatpush1.bf16.xpose.msra.mxu0 %v626
    %645 = vmatprep.subr.bf16.mxu0 0
    %646 = vmatpush1.bf16.xpose.msra.mxu0 %v623
    %647 = vmatprep.subr.bf16.mxu0 0
    %648 = vmatpush1.bf16.xpose.msra.mxu0 %v620
    %649 = vmatprep.subr.bf16.mxu0 0
    %650 = vmatpush1.bf16.xpose.msra.mxu0 %v617
    %651 = vmatprep.subr.bf16.mxu0 0
    %652 = vmatpush1.bf16.xpose.msra.mxu0 %v614
    %653 = vmatprep.subr.bf16.mxu0 0
    %654 = vmatpush2.bf16.xpose.msra.mxu0 0
    %655 = vmatprep.subr.bf16.mxu0 0
    %656 = vmatpush2.bf16.xpose.msra.mxu0 0
    %657 = vmatprep.subr.bf16.mxu0 0
    %658 = vmatpush2.bf16.xpose.msra.mxu0 0
    %659 = vmatprep.subr.bf16.mxu0 0
    %660 = vmatpush2.bf16.xpose.msra.mxu0 0
    %661 = vmatprep.subr.bf16.mxu0 0
    %662 = vmatpush2.bf16.xpose.msra.mxu0 0
    %663 = vmatprep.subr.bf16.mxu0 0
    %664 = vmatpush2.bf16.xpose.msra.mxu0 0
    %665 = vmatprep.subr.bf16.mxu0 0
    %666 = vmatpush2.bf16.xpose.msra.mxu0 0
    %667 = vmatprep.subr.bf16.mxu0 0
    %668 = vmatpush2.bf16.xpose.msra.mxu0 0
    %669 = vmatprep.mubr.bf16.mxu0 0
    %670 = vmatmul.mubr.bf16.gmra.mxu0 %v611
    %v671 = vpop.f32.mrf.mxu0
    %v672 = vadd.f32 %v608, %v671
    %v673 = vpop.f32.mrf.mxu0
    %v674 = vpop.f32.mrf.mxu0
    %v675 = vpop.f32.mrf.mxu0
    %676 = vdwg.mxu0
    %677 = vst [vmem:[#allocation3] sm:$0x1] %v672
    // Predicated region
    $region38: #{tpu_custom_call.1} parent=1 // pred_check
      _
    $region39: #{tpu_custom_call.1} parent=1 // pred_check_branch
      %679 = sbr.rel (0) target = $region41
    $region40: #{tpu_custom_call.1} parent=1 // pred_region
      %s681 = ssub.s32 16, 16
      %682 = vsyncadd [#allocation4], %s681
      %s684 = sshll.u32 [#allocation3], 4
      %s685 = int_to_ptr.vmem [resolvable:$true] %s684
      %687 = dma.vmem_to_hbm [thread:$0]  %s685, 16, %s9, [#allocation4]
    $region41: #{tpu_custom_call.1} parent=1 // pred_fallthru
      _
    // Predicated region
    $region42: #{tpu_custom_call.1} parent=1 // pred_check
      _
    $region43: #{tpu_custom_call.1} parent=1 // pred_check_branch
      %689 = sbr.rel (0) target = $region45
    $region44: #{tpu_custom_call.1} parent=1 // pred_region
      %690 = dma.done [#allocation4], 16
    $region45: #{tpu_custom_call.1} parent=1 // pred_fallthru
      _
    %691 = vsyncpa [#allocation4], 1

</llo_original>
